<compile_context>
chip_gen: v6e
topology: v6e:2x2x1
jax: 0.10.0
libtpu: 0.0.40
codegen_flags: <defaults>
</compile_context>

<pallas_src>
import jax
import jax.numpy as jnp
from jax import lax
from jax.experimental import pallas as pl
from jax.experimental.pallas import tpu as pltpu

OUT_DIM = 512


def embedder_kernel(x_ref, w_ref, b_ref, o_ref):
    # x_ref: [TB, C, HW]      w_ref: [C, OUT] (f32)
    # b_ref: [1, OUT] (f32)   o_ref: [TB, OUT] (f32)
    hw = x_ref.shape[-1]

    # Global-average-pool over the spatial (lane) axis; accumulate in f32
    # without materializing an upcast copy of the streamed tile.
    feat = jnp.sum(x_ref[...], axis=-1, dtype=jnp.float32) * (1.0 / hw)   # [TB, C]

    # fc: Linear(C -> 512) on the MXU, f32 accumulation.
    y = jnp.dot(feat, w_ref[...], preferred_element_type=jnp.float32)
    y = y + b_ref[...]                                                    # [TB, OUT]

    # F.normalize(p=2, dim=1, eps=1e-12): y / max(||y||, eps)
    # == y * rsqrt(max(sum(y^2), eps^2)); rsqrt runs on the EUP slot.
    sq = jnp.sum(y * y, axis=-1, keepdims=True)                           # [TB, 1]
    inv = lax.rsqrt(jnp.maximum(sq, 1e-24))
    o_ref[...] = (y * inv).astype(o_ref.dtype)


def _round_tb(tb, batch):
    """Clamp a candidate batch tile to a legal value: == B or a multiple of 8."""
    if tb >= batch:
        return batch
    return max(8, (tb // 8) * 8)


def embedder_forward(x_nchw, w, b, *, block_b=None):
    """x_nchw: [B, C, H, W]; w: [C, OUT_DIM]; b: [OUT_DIM] -> [B, OUT_DIM] f32."""
    B, C, H, W = x_nchw.shape
    HW = H * W

    # Free reshape only (no transpose / dtype cast => no extra HBM pass on the
    # dominant tensor).  The spatial pool happens in-kernel over the lane axis.
    x3 = x_nchw.reshape(B, C, HW)
    if x3.dtype not in (jnp.float32, jnp.bfloat16):
        x3 = x3.astype(jnp.float32)
    w2 = w.astype(jnp.float32)
    b2 = b.reshape(1, OUT_DIM).astype(jnp.float32)

    x_item = jnp.dtype(x3.dtype).itemsize

    # Generation-aware VMEM budget (v5e/v6e: 128 MiB physical, v7x: 64 MiB).
    try:
        vmem_cap = int(pltpu.get_tpu_info().vmem_capacity_bytes)
    except Exception:
        vmem_cap = 64 << 20  # conservative fallback
    # Budget for the double-buffered x stream: 48 MiB on 128 MiB parts, 24 MiB on v7x.
    x_budget = (3 * vmem_cap) // 8

    if block_b is None:
        TB = _round_tb(min(B, 128), B)
        # Shrink until the double-buffered x tile fits the budget (multiple of 8).
        while TB > 8 and 2 * TB * C * HW * x_item > x_budget:
            TB = _round_tb(TB // 2, B)
        # Keep >= 2 grid steps when the batch allows, so the "parallel" batch
        # axis can feed both TensorCores on v7x (harmless on v5e/v6e).
        if B > 8 and pl.cdiv(B, TB) < 2:
            TB = _round_tb(TB // 2, B)
    else:
        TB = block_b
        assert TB == B or TB % 8 == 0, "block_b must be B or a multiple of 8"

    grid = (pl.cdiv(B, TB),)

    # Honest VMEM accounting: double-buffered x + out tiles, w/b (worst case
    # double-buffered), small f32 intermediates; clamp limit to 3/4 of physical.
    wb_bytes = (C * OUT_DIM + OUT_DIM) * 4
    vmem_need = (2 * TB * C * HW * x_item
                 + 2 * wb_bytes
                 + 2 * TB * OUT_DIM * 4
                 + TB * C * 4 + TB * OUT_DIM * 4)
    vmem_limit = int(min(max(vmem_need + (4 << 20), 16 << 20), (3 * vmem_cap) // 4))

    def build(wb_pipeline_mode):
        wb_kw = {} if wb_pipeline_mode is None else {"pipeline_mode": wb_pipeline_mode}
        return pl.pallas_call(
            embedder_kernel,
            out_shape=jax.ShapeDtypeStruct((B, OUT_DIM), jnp.float32),
            grid=grid,
            in_specs=[
                # x: streamed per batch tile (double-buffered by the pipeline).
                pl.BlockSpec((TB, C, HW), lambda i: (i, 0, 0)),
                # w, b: constant index_map -> fetched once, VMEM-resident
                # (single-buffered when this jax version supports Buffered(1)).
                pl.BlockSpec((C, OUT_DIM), lambda i: (0, 0), **wb_kw),
                pl.BlockSpec((1, OUT_DIM), lambda i: (0, 0), **wb_kw),
            ],
            # Lane-dense output block (512 = 4 * 128): unmasked vector stores.
            out_specs=pl.BlockSpec((TB, OUT_DIM), lambda i: (i, 0)),
            compiler_params=pltpu.CompilerParams(
                dimension_semantics=("parallel",),   # shards batch across TCs on v7x
                vmem_limit_bytes=vmem_limit,
            ),
        )

    if hasattr(pl, "Buffered"):
        try:
            return build(pl.Buffered(1))(x3, w2, b2)
        except Exception:
            pass  # fall back to default double-buffered w / b
    return build(None)(x3, w2, b2)


if __name__ == "__main__":
    # Small, deterministic shapes: batch=4, channels(features)=64, spatial=8x8.
    B, C, H, W = 4, 64, 8, 8

    key = jax.random.PRNGKey(0)
    kx, kw, kb = jax.random.split(key, 3)

    x = jax.random.normal(kx, (B, C, H, W), dtype=jnp.float32)

    # nn.Linear(C, 512) default init: U(-1/sqrt(C), 1/sqrt(C)) for weight & bias.
    bound = 1.0 / jnp.sqrt(jnp.float32(C))
    w = jax.random.uniform(kw, (C, OUT_DIM), jnp.float32, -bound, bound)
    b = jax.random.uniform(kb, (OUT_DIM,), jnp.float32, -bound, bound)

    out = embedder_forward(x, w, b)
    out = jax.block_until_ready(out)

    # Reference in plain JAX (same math, f32 throughout).
    feat_ref = jnp.mean(x.reshape(B, C, H * W), axis=-1)
    y_ref = feat_ref @ w + b
    ref = y_ref / jnp.maximum(
        jnp.sqrt(jnp.sum(y_ref * y_ref, axis=-1, keepdims=True)), 1e-12
    )

    assert out.shape == (B, OUT_DIM)
    assert jnp.allclose(out, ref, atol=1e-5, rtol=1e-4)

    print("KERNEL_OK")
</pallas_src>

<mosaic_0001>
module attributes {stable_mosaic.version = 11 : i64} {
  func.func @embedder_kernel(%arg0: i32, %arg1: memref<4x64x64xf32, #tpu.memory_space<vmem>>, %arg2: memref<64x512xf32, #tpu.memory_space<vmem>>, %arg3: memref<1x512xf32, #tpu.memory_space<vmem>>, %arg4: memref<4x512xf32, #tpu.memory_space<vmem>>) attributes {dimension_semantics = [#tpu.dimension_semantics<parallel>], iteration_bounds = array<i64: 1>, scalar_prefetch = 0 : i64, scratch_operands = 0 : i64, tpu.core_type = #tpu.core_type<tc>, window_params = [{transform_indices = @transform_0, window_bounds = array<i64: 4, 64, 64>}, {pipeline_mode = #tpu.pipeline_mode<synchronous>, transform_indices = @transform_1, window_bounds = array<i64: 64, 512>}, {pipeline_mode = #tpu.pipeline_mode<synchronous>, transform_indices = @transform_2, window_bounds = array<i64: 1, 512>}, {transform_indices = @transform_3, window_bounds = array<i64: 4, 512>}]} {
    %c0 = arith.constant 0 : index
    %c0_0 = arith.constant 0 : index
    %c0_1 = arith.constant 0 : index
    %0 = vector.load %arg1[%c0, %c0_0, %c0_1] : memref<4x64x64xf32, #tpu.memory_space<vmem>>, vector<4x64x64xf32>
    %cst = arith.constant dense<0.000000e+00> : vector<4x64xf32>
    %1 = vector.multi_reduction <add>, %0, %cst [2] : vector<4x64x64xf32> to vector<4x64xf32>
    %cst_2 = arith.constant 1.562500e-02 : f32
    %2 = vector.broadcast %cst_2 : f32 to vector<4x64xf32>
    %3 = arith.mulf %1, %2 : vector<4x64xf32>
    %c0_3 = arith.constant 0 : index
    %c0_4 = arith.constant 0 : index
    %4 = vector.load %arg2[%c0_3, %c0_4] : memref<64x512xf32, #tpu.memory_space<vmem>>, vector<64x512xf32>
    %cst_5 = arith.constant dense<0.000000e+00> : vector<4x512xf32>
    %5 = tpu.matmul %3, %4, %cst_5 {dimension_numbers = #tpu.dot_dimension_numbers<[1], [0], [0], [1], [0, 0, 1, 1], [], []>} : vector<4x64xf32>, vector<64x512xf32>, vector<4x512xf32> -> vector<4x512xf32>
    %c0_6 = arith.constant 0 : index
    %c0_7 = arith.constant 0 : index
    %6 = vector.load %arg3[%c0_6, %c0_7] : memref<1x512xf32, #tpu.memory_space<vmem>>, vector<1x512xf32>
    %7 = vector.broadcast %6 : vector<1x512xf32> to vector<4x512xf32>
    %8 = arith.addf %5, %7 : vector<4x512xf32>
    %9 = arith.mulf %8, %8 : vector<4x512xf32>
    %cst_8 = arith.constant dense<0.000000e+00> : vector<4xf32>
    %10 = vector.multi_reduction <add>, %9, %cst_8 [1] : vector<4x512xf32> to vector<4xf32>
    %11 = vector.shape_cast %10 : vector<4xf32> to vector<4x1xf32>
    %cst_9 = arith.constant 1.000000e-24 : f32
    %12 = vector.broadcast %cst_9 : f32 to vector<4x1xf32>
    %13 = arith.maximumf %11, %12 : vector<4x1xf32>
    %14 = math.rsqrt %13 : vector<4x1xf32>
    %15 = vector.broadcast %14 : vector<4x1xf32> to vector<4x512xf32>
    %16 = arith.mulf %8, %15 : vector<4x512xf32>
    %c0_10 = arith.constant 0 : index
    %c0_11 = arith.constant 0 : index
    %17 = vector.load %arg4[%c0_10, %c0_11] : memref<4x512xf32, #tpu.memory_space<vmem>>, vector<4x512xf32>
    tpu.vector_store %arg4[%c0_10, %c0_11], %16 {strides = array<i32>} : memref<4x512xf32, #tpu.memory_space<vmem>>, vector<4x512xf32>,
    return
  }
  func.func @transform_0(%arg0: i32) -> (i32, i32, i32) {
    %c0_i32 = arith.constant 0 : i32
    %c0_i32_0 = arith.constant 0 : i32
    %c0_i32_1 = arith.constant 0 : i32
    return %arg0, %c0_i32, %c0_i32_0 : i32, i32, i32
  }
  func.func @transform_1(%arg0: i32) -> (i32, i32) {
    %c0_i32 = arith.constant 0 : i32
    %c0_i32_0 = arith.constant 0 : i32
    %c0_i32_1 = arith.constant 0 : i32
    return %c0_i32, %c0_i32_0 : i32, i32
  }
  func.func @transform_2(%arg0: i32) -> (i32, i32) {
    %c0_i32 = arith.constant 0 : i32
    %c0_i32_0 = arith.constant 0 : i32
    %c0_i32_1 = arith.constant 0 : i32
    return %c0_i32, %c0_i32_0 : i32, i32
  }
  func.func @transform_3(%arg0: i32) -> (i32, i32) {
    %c0_i32 = arith.constant 0 : i32
    %c0_i32_0 = arith.constant 0 : i32
    return %arg0, %c0_i32 : i32, i32
  }
}

module attributes {stable_mosaic.version = 11 : i64} {
  func.func @embedder_kernel(%arg0: i32, %arg1: memref<4x64x64xf32, #tpu.memory_space<vmem>>, %arg2: memref<64x512xf32, #tpu.memory_space<vmem>>, %arg3: memref<1x512xf32, #tpu.memory_space<vmem>>, %arg4: memref<4x512xf32, #tpu.memory_space<vmem>>) attributes {dimension_semantics = [#tpu.dimension_semantics<parallel>], iteration_bounds = array<i64: 1>, scalar_prefetch = 0 : i64, scratch_operands = 0 : i64, tpu.core_type = #tpu.core_type<tc>, window_params = [{transform_indices = @transform_0, window_bounds = array<i64: 4, 64, 64>}, {pipeline_mode = #tpu.pipeline_mode<synchronous>, transform_indices = @transform_1, window_bounds = array<i64: 64, 512>}, {pipeline_mode = #tpu.pipeline_mode<synchronous>, transform_indices = @transform_2, window_bounds = array<i64: 1, 512>}, {transform_indices = @transform_3, window_bounds = array<i64: 4, 512>}]} {
    %c0 = arith.constant 0 : index
    %c0_0 = arith.constant 0 : index
    %c0_1 = arith.constant 0 : index
    %0 = vector.load %arg1[%c0, %c0_0, %c0_1] : memref<4x64x64xf32, #tpu.memory_space<vmem>>, vector<4x64x64xf32>
    %cst = arith.constant dense<0.000000e+00> : vector<4x64xf32>
    %1 = vector.multi_reduction <add>, %0, %cst [2] : vector<4x64x64xf32> to vector<4x64xf32>
    %cst_2 = arith.constant 1.562500e-02 : f32
    %2 = vector.broadcast %cst_2 : f32 to vector<4x64xf32>
    %3 = arith.mulf %1, %2 : vector<4x64xf32>
    %c0_3 = arith.constant 0 : index
    %c0_4 = arith.constant 0 : index
    %4 = vector.load %arg2[%c0_3, %c0_4] : memref<64x512xf32, #tpu.memory_space<vmem>>, vector<64x512xf32>
    %cst_5 = arith.constant dense<0.000000e+00> : vector<4x512xf32>
    %5 = tpu.matmul %3, %4, %cst_5 {dimension_numbers = #tpu.dot_dimension_numbers<[1], [0], [0], [1], [0, 0, 1, 1], [], []>} : vector<4x64xf32>, vector<64x512xf32>, vector<4x512xf32> -> vector<4x512xf32>
    %c0_6 = arith.constant 0 : index
    %c0_7 = arith.constant 0 : index
    %6 = vector.load %arg3[%c0_6, %c0_7] : memref<1x512xf32, #tpu.memory_space<vmem>>, vector<1x512xf32>
    %7 = vector.broadcast %6 : vector<1x512xf32> to vector<4x512xf32>
    %8 = arith.addf %5, %7 : vector<4x512xf32>
    %9 = arith.mulf %8, %8 : vector<4x512xf32>
    %cst_8 = arith.constant dense<0.000000e+00> : vector<4xf32>
    %10 = vector.multi_reduction <add>, %9, %cst_8 [1] : vector<4x512xf32> to vector<4xf32>
    %11 = vector.shape_cast %10 : vector<4xf32> to vector<4x1xf32>
    %cst_9 = arith.constant 1.000000e-24 : f32
    %12 = vector.broadcast %cst_9 : f32 to vector<4x1xf32>
    %13 = arith.maximumf %11, %12 : vector<4x1xf32>
    %14 = math.rsqrt %13 : vector<4x1xf32>
    %15 = vector.broadcast %14 : vector<4x1xf32> to vector<4x512xf32>
    %16 = arith.mulf %8, %15 : vector<4x512xf32>
    %c0_10 = arith.constant 0 : index
    %c0_11 = arith.constant 0 : index
    %17 = vector.load %arg4[%c0_10, %c0_11] : memref<4x512xf32, #tpu.memory_space<vmem>>, vector<4x512xf32>
    tpu.vector_store %arg4[%c0_10, %c0_11], %16 {strides = array<i32>} : memref<4x512xf32, #tpu.memory_space<vmem>>, vector<4x512xf32>,
    return
  }
  func.func @transform_0(%arg0: i32) -> (i32, i32, i32) {
    %c0_i32 = arith.constant 0 : i32
    %c0_i32_0 = arith.constant 0 : i32
    %c0_i32_1 = arith.constant 0 : i32
    return %arg0, %c0_i32, %c0_i32_0 : i32, i32, i32
  }
  func.func @transform_1(%arg0: i32) -> (i32, i32) {
    %c0_i32 = arith.constant 0 : i32
    %c0_i32_0 = arith.constant 0 : i32
    %c0_i32_1 = arith.constant 0 : i32
    return %c0_i32, %c0_i32_0 : i32, i32
  }
  func.func @transform_2(%arg0: i32) -> (i32, i32) {
    %c0_i32 = arith.constant 0 : i32
    %c0_i32_0 = arith.constant 0 : i32
    %c0_i32_1 = arith.constant 0 : i32
    return %c0_i32, %c0_i32_0 : i32, i32
  }
  func.func @transform_3(%arg0: i32) -> (i32, i32) {
    %c0_i32 = arith.constant 0 : i32
    %c0_i32_0 = arith.constant 0 : i32
    return %arg0, %c0_i32 : i32, i32
  }
}

</mosaic_0001>

<llo_original>
// kernel: tpu_custom_call.1
$region0: #{tpu_custom_call.1}
  #allocation0 [shape = 'u32[]', space=smem, size = 0x4, offset = 0x4, fixed_abs, tag = 'smem constant byte address 0x4 - core index']
  #allocation1 [shape = 'u32[144,128]{1,0:T(1,128)}', space=vmem, size = 0x12000, scoped, tag = 'internal scratch']
  %s0 = inlined_call_operand.hbm [shape: f32[4,64,64], index: 0, kind: input, shape index: {}]
  %s1 = inlined_call_operand.hbm [shape: f32[64,512], index: 1, kind: input, shape index: {}]
  %s2 = inlined_call_operand.hbm [shape: f32[1,512], index: 2, kind: input, shape index: {}]
  %s3 = inlined_call_operand.hbm [shape: f32[4,512], index: 3, kind: output, shape index: {}]
  %s4 = sld [smem:[#allocation0]]
  $region34: #{tpu_custom_call.1} parent=0
    _
  %s6 = ssub.s32 1, %s4
  %s7 = scalar_select 0, %s6, %s4
  $region1: #{tpu_custom_call.1} parent=0
    #allocation2 [shape = 'u8[131072]{0}', space=vmem, size = 0x20000, scoped, tag = 'input window, operand 0, single buffered']
    #allocation3 [shape = 's32[1]{0}', space=sflag, size = 0x4, scoped, tag = 'scoped memory for tpu_custom_call.1']
    #allocation4 [shape = 's32[1]{0}', space=sflag, size = 0x4, scoped, tag = 'scoped memory for tpu_custom_call.1']
    #allocation5 [shape = 'u8[131072]{0}', space=vmem, size = 0x20000, scoped, tag = 'input window, operand 1, single buffered']
    #allocation6 [shape = 's32[1]{0}', space=sflag, size = 0x4, scoped, tag = 'scoped memory for tpu_custom_call.1']
    #allocation7 [shape = 'u8[2048]{0}', space=vmem, size = 0x800, scoped, tag = 'input window, operand 2, single buffered']
    #allocation8 [shape = 'u8[8192]{0}', space=vmem, size = 0x2000, scoped, tag = 'output window, operand 0, single buffered']
    %8 = vsyncpa [#allocation3], 0
    %9 = vsyncpa [#allocation6], 0
    %10 = vsyncpa [#allocation4], 0
    // Predicated region
    $region2: #{tpu_custom_call.1} parent=1 // pred_check
      _
    $region3: #{tpu_custom_call.1} parent=1 // pred_check_branch
      %12 = sbr.rel (0) target = $region5
    $region4: #{tpu_custom_call.1} parent=1 // pred_region
      %s14 = ssub.s32 4096, 4096
      %15 = vsyncadd [#allocation3], %s14
      %s16 = sshll.u32 [#allocation2], 4
      %s17 = int_to_ptr.vmem [resolvable:$true] %s16
      %22 = dma.hbm_to_vmem [thread:$0]  %s0, 4096, %s17, [#allocation3], 128, 128, 8
    $region5: #{tpu_custom_call.1} parent=1 // pred_fallthru
      _
    // Predicated region
    $region6: #{tpu_custom_call.1} parent=1 // pred_check
      _
    $region7: #{tpu_custom_call.1} parent=1 // pred_check_branch
      %24 = sbr.rel (0) target = $region9
    $region8: #{tpu_custom_call.1} parent=1 // pred_region
      %s26 = ssub.s32 4096, 4096
      %27 = vsyncadd [#allocation6], %s26
      %s28 = sshll.u32 [#allocation5], 4
      %s29 = int_to_ptr.vmem [resolvable:$true] %s28
      %34 = dma.hbm_to_vmem [thread:$0]  %s1, 4096, %s29, [#allocation6], 512, 512, 32
    $region9: #{tpu_custom_call.1} parent=1 // pred_fallthru
      _
    // Predicated region
    $region10: #{tpu_custom_call.1} parent=1 // pred_check
      _
    $region11: #{tpu_custom_call.1} parent=1 // pred_check_branch
      %36 = sbr.rel (0) target = $region13
    $region12: #{tpu_custom_call.1} parent=1 // pred_region
      %s38 = ssub.s32 64, 64
      %39 = vsyncadd [#allocation6], %s38
      %s41 = sshll.u32 [#allocation7], 4
      %s42 = int_to_ptr.vmem [resolvable:$true] %s41
      %44 = dma.hbm_to_vmem [thread:$0]  %s2, 64, %s42, [#allocation6]
    $region13: #{tpu_custom_call.1} parent=1 // pred_fallthru
      _
    // Predicated region
    $region14: #{tpu_custom_call.1} parent=1 // pred_check
      _
    $region15: #{tpu_custom_call.1} parent=1 // pred_check_branch
      %46 = sbr.rel (0) target = $region17
    $region16: #{tpu_custom_call.1} parent=1 // pred_region
      %47 = dma.done [#allocation3], 4096
    $region17: #{tpu_custom_call.1} parent=1 // pred_fallthru
      _
    // Predicated region
    $region18: #{tpu_custom_call.1} parent=1 // pred_check
      _
    $region19: #{tpu_custom_call.1} parent=1 // pred_check_branch
      %49 = sbr.rel (0) target = $region21
    $region20: #{tpu_custom_call.1} parent=1 // pred_region
      %50 = dma.done [#allocation6], 4096
    $region21: #{tpu_custom_call.1} parent=1 // pred_fallthru
      _
    // Predicated region
    $region22: #{tpu_custom_call.1} parent=1 // pred_check
      _
    $region23: #{tpu_custom_call.1} parent=1 // pred_check_branch
      %52 = sbr.rel (0) target = $region25
    $region24: #{tpu_custom_call.1} parent=1 // pred_region
      %53 = dma.done [#allocation6], 64
    $region25: #{tpu_custom_call.1} parent=1 // pred_fallthru
      _
    %v54 = vld [vmem:[#allocation2] sm:$0xff]
    %v55 = vld [vmem:[#allocation2 + $0x8] sm:$0xff]
    %v56 = vld [vmem:[#allocation2 + $0x10] sm:$0xff]
    %v57 = vld [vmem:[#allocation2 + $0x18] sm:$0xff]
    %v58 = vld [vmem:[#allocation2 + $0x20] sm:$0xff]
    %v59 = vld [vmem:[#allocation2 + $0x28] sm:$0xff]
    %v60 = vld [vmem:[#allocation2 + $0x30] sm:$0xff]
    %v61 = vld [vmem:[#allocation2 + $0x38] sm:$0xff]
    %v62 = vld [vmem:[#allocation2 + $0x40] sm:$0xff]
    %v63 = vld [vmem:[#allocation2 + $0x48] sm:$0xff]
    %v64 = vld [vmem:[#allocation2 + $0x50] sm:$0xff]
    %v65 = vld [vmem:[#allocation2 + $0x58] sm:$0xff]
    %v66 = vld [vmem:[#allocation2 + $0x60] sm:$0xff]
    %v67 = vld [vmem:[#allocation2 + $0x68] sm:$0xff]
    %v68 = vld [vmem:[#allocation2 + $0x70] sm:$0xff]
    %v69 = vld [vmem:[#allocation2 + $0x78] sm:$0xff]
    %v70 = vld [vmem:[#allocation2 + $0x80] sm:$0xff]
    %v71 = vld [vmem:[#allocation2 + $0x88] sm:$0xff]
    %v72 = vld [vmem:[#allocation2 + $0x90] sm:$0xff]
    %v73 = vld [vmem:[#allocation2 + $0x98] sm:$0xff]
    %v74 = vld [vmem:[#allocation2 + $0xa0] sm:$0xff]
    %v75 = vld [vmem:[#allocation2 + $0xa8] sm:$0xff]
    %v76 = vld [vmem:[#allocation2 + $0xb0] sm:$0xff]
    %v77 = vld [vmem:[#allocation2 + $0xb8] sm:$0xff]
    %v78 = vld [vmem:[#allocation2 + $0xc0] sm:$0xff]
    %v79 = vld [vmem:[#allocation2 + $0xc8] sm:$0xff]
    %v80 = vld [vmem:[#allocation2 + $0xd0] sm:$0xff]
    %v81 = vld [vmem:[#allocation2 + $0xd8] sm:$0xff]
    %v82 = vld [vmem:[#allocation2 + $0xe0] sm:$0xff]
    %v83 = vld [vmem:[#allocation2 + $0xe8] sm:$0xff]
    %v84 = vld [vmem:[#allocation2 + $0xf0] sm:$0xff]
    %v85 = vld [vmem:[#allocation2 + $0xf8] sm:$0xff]
    %vm86 = vcmask 523264
    %v87 = vsel %vm86, %v54, 0.0
    %88 = vadd.xlane.f32.xlu0 %v87
    %v89 = vpop.xlane.xlu0 %88
    %v90 = vsel %vm86, %v55, 0.0
    %91 = vadd.xlane.f32.xlu0 %v90
    %v92 = vpop.xlane.xlu0 %91
    %v93 = vsel %vm86, %v56, 0.0
    %94 = vadd.xlane.f32.xlu0 %v93
    %v95 = vpop.xlane.xlu0 %94
    %v96 = vsel %vm86, %v57, 0.0
    %97 = vadd.xlane.f32.xlu0 %v96
    %v98 = vpop.xlane.xlu0 %97
    %v99 = vsel %vm86, %v58, 0.0
    %100 = vadd.xlane.f32.xlu0 %v99
    %v101 = vpop.xlane.xlu0 %100
    %v102 = vsel %vm86, %v59, 0.0
    %103 = vadd.xlane.f32.xlu0 %v102
    %v104 = vpop.xlane.xlu0 %103
    %v105 = vsel %vm86, %v60, 0.0
    %106 = vadd.xlane.f32.xlu0 %v105
    %v107 = vpop.xlane.xlu0 %106
    %v108 = vsel %vm86, %v61, 0.0
    %109 = vadd.xlane.f32.xlu0 %v108
    %v110 = vpop.xlane.xlu0 %109
    %v111 = vsel %vm86, %v62, 0.0
    %112 = vadd.xlane.f32.xlu0 %v111
    %v113 = vpop.xlane.xlu0 %112
    %v114 = vsel %vm86, %v63, 0.0
    %115 = vadd.xlane.f32.xlu0 %v114
    %v116 = vpop.xlane.xlu0 %115
    %v117 = vsel %vm86, %v64, 0.0
    %118 = vadd.xlane.f32.xlu0 %v117
    %v119 = vpop.xlane.xlu0 %118
    %v120 = vsel %vm86, %v65, 0.0
    %121 = vadd.xlane.f32.xlu0 %v120
    %v122 = vpop.xlane.xlu0 %121
    %v123 = vsel %vm86, %v66, 0.0
    %124 = vadd.xlane.f32.xlu0 %v123
    %v125 = vpop.xlane.xlu0 %124
    %v126 = vsel %vm86, %v67, 0.0
    %127 = vadd.xlane.f32.xlu0 %v126
    %v128 = vpop.xlane.xlu0 %127
    %v129 = vsel %vm86, %v68, 0.0
    %130 = vadd.xlane.f32.xlu0 %v129
    %v131 = vpop.xlane.xlu0 %130
    %v132 = vsel %vm86, %v69, 0.0
    %133 = vadd.xlane.f32.xlu0 %v132
    %v134 = vpop.xlane.xlu0 %133
    %v135 = vsel %vm86, %v70, 0.0
    %136 = vadd.xlane.f32.xlu0 %v135
    %v137 = vpop.xlane.xlu0 %136
    %v138 = vsel %vm86, %v71, 0.0
    %139 = vadd.xlane.f32.xlu0 %v138
    %v140 = vpop.xlane.xlu0 %139
    %v141 = vsel %vm86, %v72, 0.0
    %142 = vadd.xlane.f32.xlu0 %v141
    %v143 = vpop.xlane.xlu0 %142
    %v144 = vsel %vm86, %v73, 0.0
    %145 = vadd.xlane.f32.xlu0 %v144
    %v146 = vpop.xlane.xlu0 %145
    %v147 = vsel %vm86, %v74, 0.0
    %148 = vadd.xlane.f32.xlu0 %v147
    %v149 = vpop.xlane.xlu0 %148
    %v150 = vsel %vm86, %v75, 0.0
    %151 = vadd.xlane.f32.xlu0 %v150
    %v152 = vpop.xlane.xlu0 %151
    %v153 = vsel %vm86, %v76, 0.0
    %154 = vadd.xlane.f32.xlu0 %v153
    %v155 = vpop.xlane.xlu0 %154
    %v156 = vsel %vm86, %v77, 0.0
    %157 = vadd.xlane.f32.xlu0 %v156
    %v158 = vpop.xlane.xlu0 %157
    %v159 = vsel %vm86, %v78, 0.0
    %160 = vadd.xlane.f32.xlu0 %v159
    %v161 = vpop.xlane.xlu0 %160
    %v162 = vsel %vm86, %v79, 0.0
    %163 = vadd.xlane.f32.xlu0 %v162
    %v164 = vpop.xlane.xlu0 %163
    %v165 = vsel %vm86, %v80, 0.0
    %166 = vadd.xlane.f32.xlu0 %v165
    %v167 = vpop.xlane.xlu0 %166
    %v168 = vsel %vm86, %v81, 0.0
    %169 = vadd.xlane.f32.xlu0 %v168
    %v170 = vpop.xlane.xlu0 %169
    %v171 = vsel %vm86, %v82, 0.0
    %172 = vadd.xlane.f32.xlu0 %v171
    %v173 = vpop.xlane.xlu0 %172
    %v174 = vsel %vm86, %v83, 0.0
    %175 = vadd.xlane.f32.xlu0 %v174
    %v176 = vpop.xlane.xlu0 %175
    %v177 = vsel %vm86, %v84, 0.0
    %178 = vadd.xlane.f32.xlu0 %v177
    %v179 = vpop.xlane.xlu0 %178
    %v180 = vsel %vm86, %v85, 0.0
    %181 = vadd.xlane.f32.xlu0 %v180
    %v182 = vpop.xlane.xlu0 %181
    %v183 = vmul.f32 %v89, 0.015625
    %v184 = vmul.f32 %v92, 0.015625
    %v185 = vmul.f32 %v95, 0.015625
    %v186 = vmul.f32 %v98, 0.015625
    %v187 = vmul.f32 %v101, 0.015625
    %v188 = vmul.f32 %v104, 0.015625
    %v189 = vmul.f32 %v107, 0.015625
    %v190 = vmul.f32 %v110, 0.015625
    %v191 = vmul.f32 %v113, 0.015625
    %v192 = vmul.f32 %v116, 0.015625
    %v193 = vmul.f32 %v119, 0.015625
    %v194 = vmul.f32 %v122, 0.015625
    %v195 = vmul.f32 %v125, 0.015625
    %v196 = vmul.f32 %v128, 0.015625
    %v197 = vmul.f32 %v131, 0.015625
    %v198 = vmul.f32 %v134, 0.015625
    %v199 = vmul.f32 %v137, 0.015625
    %v200 = vmul.f32 %v140, 0.015625
    %v201 = vmul.f32 %v143, 0.015625
    %v202 = vmul.f32 %v146, 0.015625
    %v203 = vmul.f32 %v149, 0.015625
    %v204 = vmul.f32 %v152, 0.015625
    %v205 = vmul.f32 %v155, 0.015625
    %v206 = vmul.f32 %v158, 0.015625
    %v207 = vmul.f32 %v161, 0.015625
    %v208 = vmul.f32 %v164, 0.015625
    %v209 = vmul.f32 %v167, 0.015625
    %v210 = vmul.f32 %v170, 0.015625
    %v211 = vmul.f32 %v173, 0.015625
    %v212 = vmul.f32 %v176, 0.015625
    %v213 = vmul.f32 %v179, 0.015625
    %v214 = vmul.f32 %v182, 0.015625
    %v215 = vld [vmem:[#allocation5] sm:$0xff]
    %v216 = vld [vmem:[#allocation5 + $0x8] sm:$0xff]
    %v217 = vld [vmem:[#allocation5 + $0x10] sm:$0xff]
    %v218 = vld [vmem:[#allocation5 + $0x18] sm:$0xff]
    %v219 = vld [vmem:[#allocation5 + $0x20] sm:$0xff]
    %v220 = vld [vmem:[#allocation5 + $0x28] sm:$0xff]
    %v221 = vld [vmem:[#allocation5 + $0x30] sm:$0xff]
    %v222 = vld [vmem:[#allocation5 + $0x38] sm:$0xff]
    %v223 = vld [vmem:[#allocation5 + $0x40] sm:$0xff]
    %v224 = vld [vmem:[#allocation5 + $0x48] sm:$0xff]
    %v225 = vld [vmem:[#allocation5 + $0x50] sm:$0xff]
    %v226 = vld [vmem:[#allocation5 + $0x58] sm:$0xff]
    %v227 = vld [vmem:[#allocation5 + $0x60] sm:$0xff]
    %v228 = vld [vmem:[#allocation5 + $0x68] sm:$0xff]
    %v229 = vld [vmem:[#allocation5 + $0x70] sm:$0xff]
    %v230 = vld [vmem:[#allocation5 + $0x78] sm:$0xff]
    %v231 = vld [vmem:[#allocation5 + $0x80] sm:$0xff]
    %v232 = vld [vmem:[#allocation5 + $0x88] sm:$0xff]
    %v233 = vld [vmem:[#allocation5 + $0x90] sm:$0xff]
    %v234 = vld [vmem:[#allocation5 + $0x98] sm:$0xff]
    %v235 = vld [vmem:[#allocation5 + $0xa0] sm:$0xff]
    %v236 = vld [vmem:[#allocation5 + $0xa8] sm:$0xff]
    %v237 = vld [vmem:[#allocation5 + $0xb0] sm:$0xff]
    %v238 = vld [vmem:[#allocation5 + $0xb8] sm:$0xff]
    %v239 = vld [vmem:[#allocation5 + $0xc0] sm:$0xff]
    %v240 = vld [vmem:[#allocation5 + $0xc8] sm:$0xff]
    %v241 = vld [vmem:[#allocation5 + $0xd0] sm:$0xff]
    %v242 = vld [vmem:[#allocation5 + $0xd8] sm:$0xff]
    %v243 = vld [vmem:[#allocation5 + $0xe0] sm:$0xff]
    %v244 = vld [vmem:[#allocation5 + $0xe8] sm:$0xff]
    %v245 = vld [vmem:[#allocation5 + $0xf0] sm:$0xff]
    %v246 = vld [vmem:[#allocation5 + $0xf8] sm:$0xff]
    %v247 = vld [vmem:[#allocation7] sm:$0xf]
    %v249 = vlaneseq
    %v250 = vshrl.u32 %v249, 7
    %v251 = vsub.s32 0, %v250
    %v252 = vrot.slane %v247, %v251
    %v253 = vlaneseq
    %v254 = vshrl.u32 %v253, 7
    %v255 = vsub.s32 1, %v254
    %v256 = vrot.slane %v247, %v255
    %v257 = vlaneseq
    %v258 = vshrl.u32 %v257, 7
    %v259 = vsub.s32 2, %v258
    %v260 = vrot.slane %v247, %v259
    %v261 = vlaneseq
    %v262 = vshrl.u32 %v261, 7
    %v263 = vsub.s32 3, %v262
    %v264 = vrot.slane %v247, %v263
    %v301 = vlaneseq
    %v302 = vand.u32 %v301, 127
    %v303 = vlaneseq
    %v304 = vshrl.u32 %v303, 7
    %v305 = vsub.s32 %v302, %v304
    %v306 = vrot.slane %v183, %v305
    %v307 = vadd.s32 %v302, 4294967288
    %v308 = vlaneseq
    %v309 = vshrl.u32 %v308, 7
    %v310 = vsub.s32 %v307, %v309
    %v311 = vrot.slane %v184, %v310
    %vm312 = vcmask 130112
    %v313 = vsel %vm312, %v311, %v306
    %v314 = vadd.s32 %v302, 4294967280
    %v315 = vlaneseq
    %v316 = vshrl.u32 %v315, 7
    %v317 = vsub.s32 %v314, %v316
    %v318 = vrot.slane %v185, %v317
    %vm319 = vcmask 195712
    %v320 = vsel %vm319, %v318, %v313
    %v321 = vadd.s32 %v302, 4294967272
    %v322 = vlaneseq
    %v323 = vshrl.u32 %v322, 7
    %v324 = vsub.s32 %v321, %v323
    %v325 = vrot.slane %v186, %v324
    %vm326 = vcmask 261312
    %v327 = vsel %vm326, %v325, %v320
    %v328 = vadd.s32 %v302, 4294967264
    %v329 = vlaneseq
    %v330 = vshrl.u32 %v329, 7
    %v331 = vsub.s32 %v328, %v330
    %v332 = vrot.slane %v187, %v331
    %vm333 = vcmask 326912
    %v334 = vsel %vm333, %v332, %v327
    %v335 = vadd.s32 %v302, 4294967256
    %v336 = vlaneseq
    %v337 = vshrl.u32 %v336, 7
    %v338 = vsub.s32 %v335, %v337
    %v339 = vrot.slane %v188, %v338
    %vm340 = vcmask 392512
    %v341 = vsel %vm340, %v339, %v334
    %v342 = vadd.s32 %v302, 4294967248
    %v343 = vlaneseq
    %v344 = vshrl.u32 %v343, 7
    %v345 = vsub.s32 %v342, %v344
    %v346 = vrot.slane %v189, %v345
    %vm347 = vcmask 458112
    %v348 = vsel %vm347, %v346, %v341
    %v349 = vadd.s32 %v302, 4294967240
    %v350 = vlaneseq
    %v351 = vshrl.u32 %v350, 7
    %v352 = vsub.s32 %v349, %v351
    %v353 = vrot.slane %v190, %v352
    %vm354 = vcmask 523712
    %v355 = vsel %vm354, %v353, %v348
    %v356 = vlaneseq
    %v357 = vshrl.u32 %v356, 7
    %v358 = vsub.s32 %v302, %v357
    %v359 = vrot.slane %v191, %v358
    %v360 = vlaneseq
    %v361 = vshrl.u32 %v360, 7
    %v362 = vsub.s32 %v307, %v361
    %v363 = vrot.slane %v192, %v362
    %v364 = vsel %vm312, %v363, %v359
    %v365 = vlaneseq
    %v366 = vshrl.u32 %v365, 7
    %v367 = vsub.s32 %v314, %v366
    %v368 = vrot.slane %v193, %v367
    %v369 = vsel %vm319, %v368, %v364
    %v370 = vlaneseq
    %v371 = vshrl.u32 %v370, 7
    %v372 = vsub.s32 %v321, %v371
    %v373 = vrot.slane %v194, %v372
    %v374 = vsel %vm326, %v373, %v369
    %v375 = vlaneseq
    %v376 = vshrl.u32 %v375, 7
    %v377 = vsub.s32 %v328, %v376
    %v378 = vrot.slane %v195, %v377
    %v379 = vsel %vm333, %v378, %v374
    %v380 = vlaneseq
    %v381 = vshrl.u32 %v380, 7
    %v382 = vsub.s32 %v335, %v381
    %v383 = vrot.slane %v196, %v382
    %v384 = vsel %vm340, %v383, %v379
    %v385 = vlaneseq
    %v386 = vshrl.u32 %v385, 7
    %v387 = vsub.s32 %v342, %v386
    %v388 = vrot.slane %v197, %v387
    %v389 = vsel %vm347, %v388, %v384
    %v390 = vlaneseq
    %v391 = vshrl.u32 %v390, 7
    %v392 = vsub.s32 %v349, %v391
    %v393 = vrot.slane %v198, %v392
    %v394 = vsel %vm354, %v393, %v389
    %v395 = vlaneseq
    %v396 = vshrl.u32 %v395, 7
    %v397 = vsub.s32 %v302, %v396
    %v398 = vrot.slane %v199, %v397
    %v399 = vlaneseq
    %v400 = vshrl.u32 %v399, 7
    %v401 = vsub.s32 %v307, %v400
    %v402 = vrot.slane %v200, %v401
    %v403 = vsel %vm312, %v402, %v398
    %v404 = vlaneseq
    %v405 = vshrl.u32 %v404, 7
    %v406 = vsub.s32 %v314, %v405
    %v407 = vrot.slane %v201, %v406
    %v408 = vsel %vm319, %v407, %v403
    %v409 = vlaneseq
    %v410 = vshrl.u32 %v409, 7
    %v411 = vsub.s32 %v321, %v410
    %v412 = vrot.slane %v202, %v411
    %v413 = vsel %vm326, %v412, %v408
    %v414 = vlaneseq
    %v415 = vshrl.u32 %v414, 7
    %v416 = vsub.s32 %v328, %v415
    %v417 = vrot.slane %v203, %v416
    %v418 = vsel %vm333, %v417, %v413
    %v419 = vlaneseq
    %v420 = vshrl.u32 %v419, 7
    %v421 = vsub.s32 %v335, %v420
    %v422 = vrot.slane %v204, %v421
    %v423 = vsel %vm340, %v422, %v418
    %v424 = vlaneseq
    %v425 = vshrl.u32 %v424, 7
    %v426 = vsub.s32 %v342, %v425
    %v427 = vrot.slane %v205, %v426
    %v428 = vsel %vm347, %v427, %v423
    %v429 = vlaneseq
    %v430 = vshrl.u32 %v429, 7
    %v431 = vsub.s32 %v349, %v430
    %v432 = vrot.slane %v206, %v431
    %v433 = vsel %vm354, %v432, %v428
    %v434 = vlaneseq
    %v435 = vshrl.u32 %v434, 7
    %v436 = vsub.s32 %v302, %v435
    %v437 = vrot.slane %v207, %v436
    %v438 = vlaneseq
    %v439 = vshrl.u32 %v438, 7
    %v440 = vsub.s32 %v307, %v439
    %v441 = vrot.slane %v208, %v440
    %v442 = vsel %vm312, %v441, %v437
    %v443 = vlaneseq
    %v444 = vshrl.u32 %v443, 7
    %v445 = vsub.s32 %v314, %v444
    %v446 = vrot.slane %v209, %v445
    %v447 = vsel %vm319, %v446, %v442
    %v448 = vlaneseq
    %v449 = vshrl.u32 %v448, 7
    %v450 = vsub.s32 %v321, %v449
    %v451 = vrot.slane %v210, %v450
    %v452 = vsel %vm326, %v451, %v447
    %v453 = vlaneseq
    %v454 = vshrl.u32 %v453, 7
    %v455 = vsub.s32 %v328, %v454
    %v456 = vrot.slane %v211, %v455
    %v457 = vsel %vm333, %v456, %v452
    %v458 = vlaneseq
    %v459 = vshrl.u32 %v458, 7
    %v460 = vsub.s32 %v335, %v459
    %v461 = vrot.slane %v212, %v460
    %v462 = vsel %vm340, %v461, %v457
    %v463 = vlaneseq
    %v464 = vshrl.u32 %v463, 7
    %v465 = vsub.s32 %v342, %v464
    %v466 = vrot.slane %v213, %v465
    %v467 = vsel %vm347, %v466, %v462
    %v468 = vlaneseq
    %v469 = vshrl.u32 %v468, 7
    %v470 = vsub.s32 %v349, %v469
    %v471 = vrot.slane %v214, %v470
    %v472 = vsel %vm354, %v471, %v467
    %vm473 = vcmask 1041409
    %v474 = vsel %vm473, %v394, %v355
    %vm475 = vcmask 1042434
    %v476 = vsel %vm475, %v433, %v474
    %vm477 = vcmask 1043459
    %v478 = vsel %vm477, %v472, %v476
    %v479 = vsel %vm86, %v478, 0
    %481 = vmatprep.subr.mxu0 0.0
    %482 = vmatpush1.msra.mxu0 0.0
    %483 = vmatprep.subr.mxu0 0.0
    %484 = vmatpush1.msra.mxu0 0.0
    %485 = vmatprep.subr.mxu0 0.0
    %486 = vmatpush1.msra.mxu0 0.0
    %487 = vmatprep.subr.mxu0 0.0
    %488 = vmatpush1.msra.mxu0 0.0
    %489 = vmatprep.subr.mxu0 0.0
    %490 = vmatpush1.msra.mxu0 0.0
    %491 = vmatprep.subr.mxu0 0.0
    %492 = vmatpush1.msra.mxu0 0.0
    %493 = vmatprep.subr.mxu0 0.0
    %494 = vmatpush1.msra.mxu0 0.0
    %495 = vmatprep.subr.mxu0 0.0
    %496 = vmatpush1.msra.mxu0 0.0
    %497 = vmatprep.subr.mxu0 %v244
    %498 = vmatpush1.msra.mxu0 %v243
    %499 = vmatprep.subr.mxu0 %v240
    %500 = vmatpush1.msra.mxu0 %v239
    %501 = vmatprep.subr.mxu0 %v236
    %502 = vmatpush1.msra.mxu0 %v235
    %503 = vmatprep.subr.mxu0 %v232
    %504 = vmatpush1.msra.mxu0 %v231
    %505 = vmatprep.subr.mxu0 %v228
    %506 = vmatpush1.msra.mxu0 %v227
    %507 = vmatprep.subr.mxu0 %v224
    %508 = vmatpush1.msra.mxu0 %v223
    %509 = vmatprep.subr.mxu0 %v220
    %510 = vmatpush1.msra.mxu0 %v219
    %511 = vmatprep.subr.mxu0 %v216
    %512 = vmatpush1.msra.mxu0 %v215
    %513 = vmatprep.subr.mxu0 0.0
    %514 = vmatpush2.msra.mxu0 0.0
    %515 = vmatprep.subr.mxu0 0.0
    %516 = vmatpush2.msra.mxu0 0.0
    %517 = vmatprep.subr.mxu0 0.0
    %518 = vmatpush2.msra.mxu0 0.0
    %519 = vmatprep.subr.mxu0 0.0
    %520 = vmatpush2.msra.mxu0 0.0
    %521 = vmatprep.subr.mxu0 0.0
    %522 = vmatpush2.msra.mxu0 0.0
    %523 = vmatprep.subr.mxu0 0.0
    %524 = vmatpush2.msra.mxu0 0.0
    %525 = vmatprep.subr.mxu0 0.0
    %526 = vmatpush2.msra.mxu0 0.0
    %527 = vmatprep.subr.mxu0 0.0
    %528 = vmatpush2.msra.mxu0 0.0
    %529 = vmatprep.subr.mxu0 0.0
    %530 = vmatpush2.msra.mxu0 0.0
    %531 = vmatprep.subr.mxu0 0.0
    %532 = vmatpush2.msra.mxu0 0.0
    %533 = vmatprep.subr.mxu0 0.0
    %534 = vmatpush2.msra.mxu0 0.0
    %535 = vmatprep.subr.mxu0 0.0
    %536 = vmatpush2.msra.mxu0 0.0
    %537 = vmatprep.subr.mxu0 0.0
    %538 = vmatpush2.msra.mxu0 0.0
    %539 = vmatprep.subr.mxu0 0.0
    %540 = vmatpush2.msra.mxu0 0.0
    %541 = vmatprep.subr.mxu0 0.0
    %542 = vmatpush2.msra.mxu0 0.0
    %543 = vmatprep.subr.mxu0 0.0
    %544 = vmatpush2.msra.mxu0 0.0
    %545 = vmatprep.mubr.f32.mxu0 0.0
    %546 = vmatmul.mubr.f32.gmra.mxu0 %v479
    %v547 = vpop.f32.mrf.mxu0
    %v548 = vadd.f32 %v252, %v547
    %v549 = vpop.f32.mrf.mxu0
    %v550 = vadd.f32 %v256, %v549
    %551 = vdwg.mxu0
    %552 = vmatprep.subr.mxu0 0.0
    %553 = vmatpush1.msra.mxu0 0.0
    %554 = vmatprep.subr.mxu0 0.0
    %555 = vmatpush1.msra.mxu0 0.0
    %556 = vmatprep.subr.mxu0 0.0
    %557 = vmatpush1.msra.mxu0 0.0
    %558 = vmatprep.subr.mxu0 0.0
    %559 = vmatpush1.msra.mxu0 0.0
    %560 = vmatprep.subr.mxu0 0.0
    %561 = vmatpush1.msra.mxu0 0.0
    %562 = vmatprep.subr.mxu0 0.0
    %563 = vmatpush1.msra.mxu0 0.0
    %564 = vmatprep.subr.mxu0 0.0
    %565 = vmatpush1.msra.mxu0 0.0
    %566 = vmatprep.subr.mxu0 0.0
    %567 = vmatpush1.msra.mxu0 0.0
    %568 = vmatprep.subr.mxu0 %v246
    %569 = vmatpush1.msra.mxu0 %v245
    %570 = vmatprep.subr.mxu0 %v242
    %571 = vmatpush1.msra.mxu0 %v241
    %572 = vmatprep.subr.mxu0 %v238
    %573 = vmatpush1.msra.mxu0 %v237
    %574 = vmatprep.subr.mxu0 %v234
    %575 = vmatpush1.msra.mxu0 %v233
    %576 = vmatprep.subr.mxu0 %v230
    %577 = vmatpush1.msra.mxu0 %v229
    %578 = vmatprep.subr.mxu0 %v226
    %579 = vmatpush1.msra.mxu0 %v225
    %580 = vmatprep.subr.mxu0 %v222
    %581 = vmatpush1.msra.mxu0 %v221
    %582 = vmatprep.subr.mxu0 %v218
    %583 = vmatpush1.msra.mxu0 %v217
    %584 = vmatprep.subr.mxu0 0.0
    %585 = vmatpush2.msra.mxu0 0.0
    %586 = vmatprep.subr.mxu0 0.0
    %587 = vmatpush2.msra.mxu0 0.0
    %588 = vmatprep.subr.mxu0 0.0
    %589 = vmatpush2.msra.mxu0 0.0
    %590 = vmatprep.subr.mxu0 0.0
    %591 = vmatpush2.msra.mxu0 0.0
    %592 = vmatprep.subr.mxu0 0.0
    %593 = vmatpush2.msra.mxu0 0.0
    %594 = vmatprep.subr.mxu0 0.0
    %595 = vmatpush2.msra.mxu0 0.0
    %596 = vmatprep.subr.mxu0 0.0
    %597 = vmatpush2.msra.mxu0 0.0
    %598 = vmatprep.subr.mxu0 0.0
    %599 = vmatpush2.msra.mxu0 0.0
    %600 = vmatprep.subr.mxu0 0.0
    %601 = vmatpush2.msra.mxu0 0.0
    %602 = vmatprep.subr.mxu0 0.0
    %603 = vmatpush2.msra.mxu0 0.0
    %604 = vmatprep.subr.mxu0 0.0
    %605 = vmatpush2.msra.mxu0 0.0
    %606 = vmatprep.subr.mxu0 0.0
    %607 = vmatpush2.msra.mxu0 0.0
    %608 = vmatprep.subr.mxu0 0.0
    %609 = vmatpush2.msra.mxu0 0.0
    %610 = vmatprep.subr.mxu0 0.0
    %611 = vmatpush2.msra.mxu0 0.0
    %612 = vmatprep.subr.mxu0 0.0
    %613 = vmatpush2.msra.mxu0 0.0
    %614 = vmatprep.subr.mxu0 0.0
    %615 = vmatpush2.msra.mxu0 0.0
    %616 = vmatprep.mubr.f32.mxu0 0.0
    %617 = vmatmul.mubr.f32.gmra.mxu0 %v479
    %v618 = vpop.f32.mrf.mxu0
    %v619 = vadd.f32 %v260, %v618
    %v620 = vpop.f32.mrf.mxu0
    %v621 = vadd.f32 %v264, %v620
    %622 = vdwg.mxu0
    %v623 = vmul.f32 %v548, %v548
    %v624 = vmul.f32 %v550, %v550
    %v625 = vmul.f32 %v619, %v619
    %v626 = vmul.f32 %v621, %v621
    %vm627 = vcmask 1043456
    %v628 = vsel %vm627, %v623, 0.0
    %v629 = vsel %vm627, %v624, 0.0
    %v630 = vadd.f32 %v628, %v629
    %v631 = vsel %vm627, %v625, 0.0
    %v632 = vadd.f32 %v630, %v631
    %v633 = vsel %vm627, %v626, 0.0
    %v634 = vadd.f32 %v632, %v633
    %635 = vadd.xlane.f32.xlu0 %v634
    %v636 = vpop.xlane.xlu0 %635
    %v637 = vmax.f32 %v636, 1e-24
    %v638 = vrsqrt.pop %v637
    %v639 = vmul.f32 %v548, %v638
    %v640 = vmul.f32 %v550, %v638
    %v641 = vmul.f32 %v619, %v638
    %v642 = vmul.f32 %v621, %v638
    %v647 = vcombine.low %v639, %v640
    %v648 = vcombine.low %v641, %v642
    %651 = vst [vmem:[#allocation8] sm:$0xff] %v647
    %652 = vst [vmem:[#allocation8 + $0x8] sm:$0xff] %v648
    // Predicated region
    $region26: #{tpu_custom_call.1} parent=1 // pred_check
      _
    $region27: #{tpu_custom_call.1} parent=1 // pred_check_branch
      %654 = sbr.rel (0) target = $region29
    $region28: #{tpu_custom_call.1} parent=1 // pred_region
      %s656 = ssub.s32 256, 256
      %657 = vsyncadd [#allocation4], %s656
      %s659 = sshll.u32 [#allocation8], 4
      %s660 = int_to_ptr.vmem [resolvable:$true] %s659
      %662 = dma.vmem_to_hbm [thread:$0]  %s660, 256, %s3, [#allocation4]
    $region29: #{tpu_custom_call.1} parent=1 // pred_fallthru
      _
    // Predicated region
    $region30: #{tpu_custom_call.1} parent=1 // pred_check
      _
    $region31: #{tpu_custom_call.1} parent=1 // pred_check_branch
      %664 = sbr.rel (0) target = $region33
    $region32: #{tpu_custom_call.1} parent=1 // pred_region
      %665 = dma.done [#allocation4], 256
    $region33: #{tpu_custom_call.1} parent=1 // pred_fallthru
      _
    %666 = vsyncpa [#allocation3], 1
    %667 = vsyncpa [#allocation6], 1
    %668 = vsyncpa [#allocation4], 1

// kernel: tpu_custom_call.1
$region0: #{tpu_custom_call.1}
  #allocation0 [shape = 'u32[]', space=smem, size = 0x4, offset = 0x4, fixed_abs, tag = 'smem constant byte address 0x4 - core index']
  #allocation1 [shape = 'u32[144,128]{1,0:T(1,128)}', space=vmem, size = 0x12000, scoped, tag = 'internal scratch']
  %s0 = inlined_call_operand.hbm [shape: f32[4,64,64], index: 0, kind: input, shape index: {}]
  %s1 = inlined_call_operand.hbm [shape: f32[64,512], index: 1, kind: input, shape index: {}]
  %s2 = inlined_call_operand.hbm [shape: f32[1,512], index: 2, kind: input, shape index: {}]
  %s3 = inlined_call_operand.hbm [shape: f32[4,512], index: 3, kind: output, shape index: {}]
  %s4 = sld [smem:[#allocation0]]
  $region34: #{tpu_custom_call.1} parent=0
    _
  %s6 = ssub.s32 1, %s4
  %s7 = scalar_select 0, %s6, %s4
  $region1: #{tpu_custom_call.1} parent=0
    #allocation2 [shape = 'u8[131072]{0}', space=vmem, size = 0x20000, scoped, tag = 'input window, operand 0, single buffered']
    #allocation3 [shape = 's32[1]{0}', space=sflag, size = 0x4, scoped, tag = 'scoped memory for tpu_custom_call.1']
    #allocation4 [shape = 's32[1]{0}', space=sflag, size = 0x4, scoped, tag = 'scoped memory for tpu_custom_call.1']
    #allocation5 [shape = 'u8[131072]{0}', space=vmem, size = 0x20000, scoped, tag = 'input window, operand 1, single buffered']
    #allocation6 [shape = 's32[1]{0}', space=sflag, size = 0x4, scoped, tag = 'scoped memory for tpu_custom_call.1']
    #allocation7 [shape = 'u8[2048]{0}', space=vmem, size = 0x800, scoped, tag = 'input window, operand 2, single buffered']
    #allocation8 [shape = 'u8[8192]{0}', space=vmem, size = 0x2000, scoped, tag = 'output window, operand 0, single buffered']
    %8 = vsyncpa [#allocation3], 0
    %9 = vsyncpa [#allocation6], 0
    %10 = vsyncpa [#allocation4], 0
    // Predicated region
    $region2: #{tpu_custom_call.1} parent=1 // pred_check
      _
    $region3: #{tpu_custom_call.1} parent=1 // pred_check_branch
      %12 = sbr.rel (0) target = $region5
    $region4: #{tpu_custom_call.1} parent=1 // pred_region
      %s14 = ssub.s32 4096, 4096
      %15 = vsyncadd [#allocation3], %s14
      %s16 = sshll.u32 [#allocation2], 4
      %s17 = int_to_ptr.vmem [resolvable:$true] %s16
      %22 = dma.hbm_to_vmem [thread:$0]  %s0, 4096, %s17, [#allocation3], 128, 128, 8
    $region5: #{tpu_custom_call.1} parent=1 // pred_fallthru
      _
    // Predicated region
    $region6: #{tpu_custom_call.1} parent=1 // pred_check
      _
    $region7: #{tpu_custom_call.1} parent=1 // pred_check_branch
      %24 = sbr.rel (0) target = $region9
    $region8: #{tpu_custom_call.1} parent=1 // pred_region
      %s26 = ssub.s32 4096, 4096
      %27 = vsyncadd [#allocation6], %s26
      %s28 = sshll.u32 [#allocation5], 4
      %s29 = int_to_ptr.vmem [resolvable:$true] %s28
      %34 = dma.hbm_to_vmem [thread:$0]  %s1, 4096, %s29, [#allocation6], 512, 512, 32
    $region9: #{tpu_custom_call.1} parent=1 // pred_fallthru
      _
    // Predicated region
    $region10: #{tpu_custom_call.1} parent=1 // pred_check
      _
    $region11: #{tpu_custom_call.1} parent=1 // pred_check_branch
      %36 = sbr.rel (0) target = $region13
    $region12: #{tpu_custom_call.1} parent=1 // pred_region
      %s38 = ssub.s32 64, 64
      %39 = vsyncadd [#allocation6], %s38
      %s41 = sshll.u32 [#allocation7], 4
      %s42 = int_to_ptr.vmem [resolvable:$true] %s41
      %44 = dma.hbm_to_vmem [thread:$0]  %s2, 64, %s42, [#allocation6]
    $region13: #{tpu_custom_call.1} parent=1 // pred_fallthru
      _
    // Predicated region
    $region14: #{tpu_custom_call.1} parent=1 // pred_check
      _
    $region15: #{tpu_custom_call.1} parent=1 // pred_check_branch
      %46 = sbr.rel (0) target = $region17
    $region16: #{tpu_custom_call.1} parent=1 // pred_region
      %47 = dma.done [#allocation3], 4096
    $region17: #{tpu_custom_call.1} parent=1 // pred_fallthru
      _
    // Predicated region
    $region18: #{tpu_custom_call.1} parent=1 // pred_check
      _
    $region19: #{tpu_custom_call.1} parent=1 // pred_check_branch
      %49 = sbr.rel (0) target = $region21
    $region20: #{tpu_custom_call.1} parent=1 // pred_region
      %50 = dma.done [#allocation6], 4096
    $region21: #{tpu_custom_call.1} parent=1 // pred_fallthru
      _
    // Predicated region
    $region22: #{tpu_custom_call.1} parent=1 // pred_check
      _
    $region23: #{tpu_custom_call.1} parent=1 // pred_check_branch
      %52 = sbr.rel (0) target = $region25
    $region24: #{tpu_custom_call.1} parent=1 // pred_region
      %53 = dma.done [#allocation6], 64
    $region25: #{tpu_custom_call.1} parent=1 // pred_fallthru
      _
    %v54 = vld [vmem:[#allocation2] sm:$0xff]
    %v55 = vld [vmem:[#allocation2 + $0x8] sm:$0xff]
    %v56 = vld [vmem:[#allocation2 + $0x10] sm:$0xff]
    %v57 = vld [vmem:[#allocation2 + $0x18] sm:$0xff]
    %v58 = vld [vmem:[#allocation2 + $0x20] sm:$0xff]
    %v59 = vld [vmem:[#allocation2 + $0x28] sm:$0xff]
    %v60 = vld [vmem:[#allocation2 + $0x30] sm:$0xff]
    %v61 = vld [vmem:[#allocation2 + $0x38] sm:$0xff]
    %v62 = vld [vmem:[#allocation2 + $0x40] sm:$0xff]
    %v63 = vld [vmem:[#allocation2 + $0x48] sm:$0xff]
    %v64 = vld [vmem:[#allocation2 + $0x50] sm:$0xff]
    %v65 = vld [vmem:[#allocation2 + $0x58] sm:$0xff]
    %v66 = vld [vmem:[#allocation2 + $0x60] sm:$0xff]
    %v67 = vld [vmem:[#allocation2 + $0x68] sm:$0xff]
    %v68 = vld [vmem:[#allocation2 + $0x70] sm:$0xff]
    %v69 = vld [vmem:[#allocation2 + $0x78] sm:$0xff]
    %v70 = vld [vmem:[#allocation2 + $0x80] sm:$0xff]
    %v71 = vld [vmem:[#allocation2 + $0x88] sm:$0xff]
    %v72 = vld [vmem:[#allocation2 + $0x90] sm:$0xff]
    %v73 = vld [vmem:[#allocation2 + $0x98] sm:$0xff]
    %v74 = vld [vmem:[#allocation2 + $0xa0] sm:$0xff]
    %v75 = vld [vmem:[#allocation2 + $0xa8] sm:$0xff]
    %v76 = vld [vmem:[#allocation2 + $0xb0] sm:$0xff]
    %v77 = vld [vmem:[#allocation2 + $0xb8] sm:$0xff]
    %v78 = vld [vmem:[#allocation2 + $0xc0] sm:$0xff]
    %v79 = vld [vmem:[#allocation2 + $0xc8] sm:$0xff]
    %v80 = vld [vmem:[#allocation2 + $0xd0] sm:$0xff]
    %v81 = vld [vmem:[#allocation2 + $0xd8] sm:$0xff]
    %v82 = vld [vmem:[#allocation2 + $0xe0] sm:$0xff]
    %v83 = vld [vmem:[#allocation2 + $0xe8] sm:$0xff]
    %v84 = vld [vmem:[#allocation2 + $0xf0] sm:$0xff]
    %v85 = vld [vmem:[#allocation2 + $0xf8] sm:$0xff]
    %vm86 = vcmask 523264
    %v87 = vsel %vm86, %v54, 0.0
    %88 = vadd.xlane.f32.xlu0 %v87
    %v89 = vpop.xlane.xlu0 %88
    %v90 = vsel %vm86, %v55, 0.0
    %91 = vadd.xlane.f32.xlu0 %v90
    %v92 = vpop.xlane.xlu0 %91
    %v93 = vsel %vm86, %v56, 0.0
    %94 = vadd.xlane.f32.xlu0 %v93
    %v95 = vpop.xlane.xlu0 %94
    %v96 = vsel %vm86, %v57, 0.0
    %97 = vadd.xlane.f32.xlu0 %v96
    %v98 = vpop.xlane.xlu0 %97
    %v99 = vsel %vm86, %v58, 0.0
    %100 = vadd.xlane.f32.xlu0 %v99
    %v101 = vpop.xlane.xlu0 %100
    %v102 = vsel %vm86, %v59, 0.0
    %103 = vadd.xlane.f32.xlu0 %v102
    %v104 = vpop.xlane.xlu0 %103
    %v105 = vsel %vm86, %v60, 0.0
    %106 = vadd.xlane.f32.xlu0 %v105
    %v107 = vpop.xlane.xlu0 %106
    %v108 = vsel %vm86, %v61, 0.0
    %109 = vadd.xlane.f32.xlu0 %v108
    %v110 = vpop.xlane.xlu0 %109
    %v111 = vsel %vm86, %v62, 0.0
    %112 = vadd.xlane.f32.xlu0 %v111
    %v113 = vpop.xlane.xlu0 %112
    %v114 = vsel %vm86, %v63, 0.0
    %115 = vadd.xlane.f32.xlu0 %v114
    %v116 = vpop.xlane.xlu0 %115
    %v117 = vsel %vm86, %v64, 0.0
    %118 = vadd.xlane.f32.xlu0 %v117
    %v119 = vpop.xlane.xlu0 %118
    %v120 = vsel %vm86, %v65, 0.0
    %121 = vadd.xlane.f32.xlu0 %v120
    %v122 = vpop.xlane.xlu0 %121
    %v123 = vsel %vm86, %v66, 0.0
    %124 = vadd.xlane.f32.xlu0 %v123
    %v125 = vpop.xlane.xlu0 %124
    %v126 = vsel %vm86, %v67, 0.0
    %127 = vadd.xlane.f32.xlu0 %v126
    %v128 = vpop.xlane.xlu0 %127
    %v129 = vsel %vm86, %v68, 0.0
    %130 = vadd.xlane.f32.xlu0 %v129
    %v131 = vpop.xlane.xlu0 %130
    %v132 = vsel %vm86, %v69, 0.0
    %133 = vadd.xlane.f32.xlu0 %v132
    %v134 = vpop.xlane.xlu0 %133
    %v135 = vsel %vm86, %v70, 0.0
    %136 = vadd.xlane.f32.xlu0 %v135
    %v137 = vpop.xlane.xlu0 %136
    %v138 = vsel %vm86, %v71, 0.0
    %139 = vadd.xlane.f32.xlu0 %v138
    %v140 = vpop.xlane.xlu0 %139
    %v141 = vsel %vm86, %v72, 0.0
    %142 = vadd.xlane.f32.xlu0 %v141
    %v143 = vpop.xlane.xlu0 %142
    %v144 = vsel %vm86, %v73, 0.0
    %145 = vadd.xlane.f32.xlu0 %v144
    %v146 = vpop.xlane.xlu0 %145
    %v147 = vsel %vm86, %v74, 0.0
    %148 = vadd.xlane.f32.xlu0 %v147
    %v149 = vpop.xlane.xlu0 %148
    %v150 = vsel %vm86, %v75, 0.0
    %151 = vadd.xlane.f32.xlu0 %v150
    %v152 = vpop.xlane.xlu0 %151
    %v153 = vsel %vm86, %v76, 0.0
    %154 = vadd.xlane.f32.xlu0 %v153
    %v155 = vpop.xlane.xlu0 %154
    %v156 = vsel %vm86, %v77, 0.0
    %157 = vadd.xlane.f32.xlu0 %v156
    %v158 = vpop.xlane.xlu0 %157
    %v159 = vsel %vm86, %v78, 0.0
    %160 = vadd.xlane.f32.xlu0 %v159
    %v161 = vpop.xlane.xlu0 %160
    %v162 = vsel %vm86, %v79, 0.0
    %163 = vadd.xlane.f32.xlu0 %v162
    %v164 = vpop.xlane.xlu0 %163
    %v165 = vsel %vm86, %v80, 0.0
    %166 = vadd.xlane.f32.xlu0 %v165
    %v167 = vpop.xlane.xlu0 %166
    %v168 = vsel %vm86, %v81, 0.0
    %169 = vadd.xlane.f32.xlu0 %v168
    %v170 = vpop.xlane.xlu0 %169
    %v171 = vsel %vm86, %v82, 0.0
    %172 = vadd.xlane.f32.xlu0 %v171
    %v173 = vpop.xlane.xlu0 %172
    %v174 = vsel %vm86, %v83, 0.0
    %175 = vadd.xlane.f32.xlu0 %v174
    %v176 = vpop.xlane.xlu0 %175
    %v177 = vsel %vm86, %v84, 0.0
    %178 = vadd.xlane.f32.xlu0 %v177
    %v179 = vpop.xlane.xlu0 %178
    %v180 = vsel %vm86, %v85, 0.0
    %181 = vadd.xlane.f32.xlu0 %v180
    %v182 = vpop.xlane.xlu0 %181
    %v183 = vmul.f32 %v89, 0.015625
    %v184 = vmul.f32 %v92, 0.015625
    %v185 = vmul.f32 %v95, 0.015625
    %v186 = vmul.f32 %v98, 0.015625
    %v187 = vmul.f32 %v101, 0.015625
    %v188 = vmul.f32 %v104, 0.015625
    %v189 = vmul.f32 %v107, 0.015625
    %v190 = vmul.f32 %v110, 0.015625
    %v191 = vmul.f32 %v113, 0.015625
    %v192 = vmul.f32 %v116, 0.015625
    %v193 = vmul.f32 %v119, 0.015625
    %v194 = vmul.f32 %v122, 0.015625
    %v195 = vmul.f32 %v125, 0.015625
    %v196 = vmul.f32 %v128, 0.015625
    %v197 = vmul.f32 %v131, 0.015625
    %v198 = vmul.f32 %v134, 0.015625
    %v199 = vmul.f32 %v137, 0.015625
    %v200 = vmul.f32 %v140, 0.015625
    %v201 = vmul.f32 %v143, 0.015625
    %v202 = vmul.f32 %v146, 0.015625
    %v203 = vmul.f32 %v149, 0.015625
    %v204 = vmul.f32 %v152, 0.015625
    %v205 = vmul.f32 %v155, 0.015625
    %v206 = vmul.f32 %v158, 0.015625
    %v207 = vmul.f32 %v161, 0.015625
    %v208 = vmul.f32 %v164, 0.015625
    %v209 = vmul.f32 %v167, 0.015625
    %v210 = vmul.f32 %v170, 0.015625
    %v211 = vmul.f32 %v173, 0.015625
    %v212 = vmul.f32 %v176, 0.015625
    %v213 = vmul.f32 %v179, 0.015625
    %v214 = vmul.f32 %v182, 0.015625
    %v215 = vld [vmem:[#allocation5] sm:$0xff]
    %v216 = vld [vmem:[#allocation5 + $0x8] sm:$0xff]
    %v217 = vld [vmem:[#allocation5 + $0x10] sm:$0xff]
    %v218 = vld [vmem:[#allocation5 + $0x18] sm:$0xff]
    %v219 = vld [vmem:[#allocation5 + $0x20] sm:$0xff]
    %v220 = vld [vmem:[#allocation5 + $0x28] sm:$0xff]
    %v221 = vld [vmem:[#allocation5 + $0x30] sm:$0xff]
    %v222 = vld [vmem:[#allocation5 + $0x38] sm:$0xff]
    %v223 = vld [vmem:[#allocation5 + $0x40] sm:$0xff]
    %v224 = vld [vmem:[#allocation5 + $0x48] sm:$0xff]
    %v225 = vld [vmem:[#allocation5 + $0x50] sm:$0xff]
    %v226 = vld [vmem:[#allocation5 + $0x58] sm:$0xff]
    %v227 = vld [vmem:[#allocation5 + $0x60] sm:$0xff]
    %v228 = vld [vmem:[#allocation5 + $0x68] sm:$0xff]
    %v229 = vld [vmem:[#allocation5 + $0x70] sm:$0xff]
    %v230 = vld [vmem:[#allocation5 + $0x78] sm:$0xff]
    %v231 = vld [vmem:[#allocation5 + $0x80] sm:$0xff]
    %v232 = vld [vmem:[#allocation5 + $0x88] sm:$0xff]
    %v233 = vld [vmem:[#allocation5 + $0x90] sm:$0xff]
    %v234 = vld [vmem:[#allocation5 + $0x98] sm:$0xff]
    %v235 = vld [vmem:[#allocation5 + $0xa0] sm:$0xff]
    %v236 = vld [vmem:[#allocation5 + $0xa8] sm:$0xff]
    %v237 = vld [vmem:[#allocation5 + $0xb0] sm:$0xff]
    %v238 = vld [vmem:[#allocation5 + $0xb8] sm:$0xff]
    %v239 = vld [vmem:[#allocation5 + $0xc0] sm:$0xff]
    %v240 = vld [vmem:[#allocation5 + $0xc8] sm:$0xff]
    %v241 = vld [vmem:[#allocation5 + $0xd0] sm:$0xff]
    %v242 = vld [vmem:[#allocation5 + $0xd8] sm:$0xff]
    %v243 = vld [vmem:[#allocation5 + $0xe0] sm:$0xff]
    %v244 = vld [vmem:[#allocation5 + $0xe8] sm:$0xff]
    %v245 = vld [vmem:[#allocation5 + $0xf0] sm:$0xff]
    %v246 = vld [vmem:[#allocation5 + $0xf8] sm:$0xff]
    %v247 = vld [vmem:[#allocation7] sm:$0xf]
    %v249 = vlaneseq
    %v250 = vshrl.u32 %v249, 7
    %v251 = vsub.s32 0, %v250
    %v252 = vrot.slane %v247, %v251
    %v253 = vlaneseq
    %v254 = vshrl.u32 %v253, 7
    %v255 = vsub.s32 1, %v254
    %v256 = vrot.slane %v247, %v255
    %v257 = vlaneseq
    %v258 = vshrl.u32 %v257, 7
    %v259 = vsub.s32 2, %v258
    %v260 = vrot.slane %v247, %v259
    %v261 = vlaneseq
    %v262 = vshrl.u32 %v261, 7
    %v263 = vsub.s32 3, %v262
    %v264 = vrot.slane %v247, %v263
    %v301 = vlaneseq
    %v302 = vand.u32 %v301, 127
    %v303 = vlaneseq
    %v304 = vshrl.u32 %v303, 7
    %v305 = vsub.s32 %v302, %v304
    %v306 = vrot.slane %v183, %v305
    %v307 = vadd.s32 %v302, 4294967288
    %v308 = vlaneseq
    %v309 = vshrl.u32 %v308, 7
    %v310 = vsub.s32 %v307, %v309
    %v311 = vrot.slane %v184, %v310
    %vm312 = vcmask 130112
    %v313 = vsel %vm312, %v311, %v306
    %v314 = vadd.s32 %v302, 4294967280
    %v315 = vlaneseq
    %v316 = vshrl.u32 %v315, 7
    %v317 = vsub.s32 %v314, %v316
    %v318 = vrot.slane %v185, %v317
    %vm319 = vcmask 195712
    %v320 = vsel %vm319, %v318, %v313
    %v321 = vadd.s32 %v302, 4294967272
    %v322 = vlaneseq
    %v323 = vshrl.u32 %v322, 7
    %v324 = vsub.s32 %v321, %v323
    %v325 = vrot.slane %v186, %v324
    %vm326 = vcmask 261312
    %v327 = vsel %vm326, %v325, %v320
    %v328 = vadd.s32 %v302, 4294967264
    %v329 = vlaneseq
    %v330 = vshrl.u32 %v329, 7
    %v331 = vsub.s32 %v328, %v330
    %v332 = vrot.slane %v187, %v331
    %vm333 = vcmask 326912
    %v334 = vsel %vm333, %v332, %v327
    %v335 = vadd.s32 %v302, 4294967256
    %v336 = vlaneseq
    %v337 = vshrl.u32 %v336, 7
    %v338 = vsub.s32 %v335, %v337
    %v339 = vrot.slane %v188, %v338
    %vm340 = vcmask 392512
    %v341 = vsel %vm340, %v339, %v334
    %v342 = vadd.s32 %v302, 4294967248
    %v343 = vlaneseq
    %v344 = vshrl.u32 %v343, 7
    %v345 = vsub.s32 %v342, %v344
    %v346 = vrot.slane %v189, %v345
    %vm347 = vcmask 458112
    %v348 = vsel %vm347, %v346, %v341
    %v349 = vadd.s32 %v302, 4294967240
    %v350 = vlaneseq
    %v351 = vshrl.u32 %v350, 7
    %v352 = vsub.s32 %v349, %v351
    %v353 = vrot.slane %v190, %v352
    %vm354 = vcmask 523712
    %v355 = vsel %vm354, %v353, %v348
    %v356 = vlaneseq
    %v357 = vshrl.u32 %v356, 7
    %v358 = vsub.s32 %v302, %v357
    %v359 = vrot.slane %v191, %v358
    %v360 = vlaneseq
    %v361 = vshrl.u32 %v360, 7
    %v362 = vsub.s32 %v307, %v361
    %v363 = vrot.slane %v192, %v362
    %v364 = vsel %vm312, %v363, %v359
    %v365 = vlaneseq
    %v366 = vshrl.u32 %v365, 7
    %v367 = vsub.s32 %v314, %v366
    %v368 = vrot.slane %v193, %v367
    %v369 = vsel %vm319, %v368, %v364
    %v370 = vlaneseq
    %v371 = vshrl.u32 %v370, 7
    %v372 = vsub.s32 %v321, %v371
    %v373 = vrot.slane %v194, %v372
    %v374 = vsel %vm326, %v373, %v369
    %v375 = vlaneseq
    %v376 = vshrl.u32 %v375, 7
    %v377 = vsub.s32 %v328, %v376
    %v378 = vrot.slane %v195, %v377
    %v379 = vsel %vm333, %v378, %v374
    %v380 = vlaneseq
    %v381 = vshrl.u32 %v380, 7
    %v382 = vsub.s32 %v335, %v381
    %v383 = vrot.slane %v196, %v382
    %v384 = vsel %vm340, %v383, %v379
    %v385 = vlaneseq
    %v386 = vshrl.u32 %v385, 7
    %v387 = vsub.s32 %v342, %v386
    %v388 = vrot.slane %v197, %v387
    %v389 = vsel %vm347, %v388, %v384
    %v390 = vlaneseq
    %v391 = vshrl.u32 %v390, 7
    %v392 = vsub.s32 %v349, %v391
    %v393 = vrot.slane %v198, %v392
    %v394 = vsel %vm354, %v393, %v389
    %v395 = vlaneseq
    %v396 = vshrl.u32 %v395, 7
    %v397 = vsub.s32 %v302, %v396
    %v398 = vrot.slane %v199, %v397
    %v399 = vlaneseq
    %v400 = vshrl.u32 %v399, 7
    %v401 = vsub.s32 %v307, %v400
    %v402 = vrot.slane %v200, %v401
    %v403 = vsel %vm312, %v402, %v398
    %v404 = vlaneseq
    %v405 = vshrl.u32 %v404, 7
    %v406 = vsub.s32 %v314, %v405
    %v407 = vrot.slane %v201, %v406
    %v408 = vsel %vm319, %v407, %v403
    %v409 = vlaneseq
    %v410 = vshrl.u32 %v409, 7
    %v411 = vsub.s32 %v321, %v410
    %v412 = vrot.slane %v202, %v411
    %v413 = vsel %vm326, %v412, %v408
    %v414 = vlaneseq
    %v415 = vshrl.u32 %v414, 7
    %v416 = vsub.s32 %v328, %v415
    %v417 = vrot.slane %v203, %v416
    %v418 = vsel %vm333, %v417, %v413
    %v419 = vlaneseq
    %v420 = vshrl.u32 %v419, 7
    %v421 = vsub.s32 %v335, %v420
    %v422 = vrot.slane %v204, %v421
    %v423 = vsel %vm340, %v422, %v418
    %v424 = vlaneseq
    %v425 = vshrl.u32 %v424, 7
    %v426 = vsub.s32 %v342, %v425
    %v427 = vrot.slane %v205, %v426
    %v428 = vsel %vm347, %v427, %v423
    %v429 = vlaneseq
    %v430 = vshrl.u32 %v429, 7
    %v431 = vsub.s32 %v349, %v430
    %v432 = vrot.slane %v206, %v431
    %v433 = vsel %vm354, %v432, %v428
    %v434 = vlaneseq
    %v435 = vshrl.u32 %v434, 7
    %v436 = vsub.s32 %v302, %v435
    %v437 = vrot.slane %v207, %v436
    %v438 = vlaneseq
    %v439 = vshrl.u32 %v438, 7
    %v440 = vsub.s32 %v307, %v439
    %v441 = vrot.slane %v208, %v440
    %v442 = vsel %vm312, %v441, %v437
    %v443 = vlaneseq
    %v444 = vshrl.u32 %v443, 7
    %v445 = vsub.s32 %v314, %v444
    %v446 = vrot.slane %v209, %v445
    %v447 = vsel %vm319, %v446, %v442
    %v448 = vlaneseq
    %v449 = vshrl.u32 %v448, 7
    %v450 = vsub.s32 %v321, %v449
    %v451 = vrot.slane %v210, %v450
    %v452 = vsel %vm326, %v451, %v447
    %v453 = vlaneseq
    %v454 = vshrl.u32 %v453, 7
    %v455 = vsub.s32 %v328, %v454
    %v456 = vrot.slane %v211, %v455
    %v457 = vsel %vm333, %v456, %v452
    %v458 = vlaneseq
    %v459 = vshrl.u32 %v458, 7
    %v460 = vsub.s32 %v335, %v459
    %v461 = vrot.slane %v212, %v460
    %v462 = vsel %vm340, %v461, %v457
    %v463 = vlaneseq
    %v464 = vshrl.u32 %v463, 7
    %v465 = vsub.s32 %v342, %v464
    %v466 = vrot.slane %v213, %v465
    %v467 = vsel %vm347, %v466, %v462
    %v468 = vlaneseq
    %v469 = vshrl.u32 %v468, 7
    %v470 = vsub.s32 %v349, %v469
    %v471 = vrot.slane %v214, %v470
    %v472 = vsel %vm354, %v471, %v467
    %vm473 = vcmask 1041409
    %v474 = vsel %vm473, %v394, %v355
    %vm475 = vcmask 1042434
    %v476 = vsel %vm475, %v433, %v474
    %vm477 = vcmask 1043459
    %v478 = vsel %vm477, %v472, %v476
    %v479 = vsel %vm86, %v478, 0
    %481 = vmatprep.subr.mxu0 0.0
    %482 = vmatpush1.msra.mxu0 0.0
    %483 = vmatprep.subr.mxu0 0.0
    %484 = vmatpush1.msra.mxu0 0.0
    %485 = vmatprep.subr.mxu0 0.0
    %486 = vmatpush1.msra.mxu0 0.0
    %487 = vmatprep.subr.mxu0 0.0
    %488 = vmatpush1.msra.mxu0 0.0
    %489 = vmatprep.subr.mxu0 0.0
    %490 = vmatpush1.msra.mxu0 0.0
    %491 = vmatprep.subr.mxu0 0.0
    %492 = vmatpush1.msra.mxu0 0.0
    %493 = vmatprep.subr.mxu0 0.0
    %494 = vmatpush1.msra.mxu0 0.0
    %495 = vmatprep.subr.mxu0 0.0
    %496 = vmatpush1.msra.mxu0 0.0
    %497 = vmatprep.subr.mxu0 %v244
    %498 = vmatpush1.msra.mxu0 %v243
    %499 = vmatprep.subr.mxu0 %v240
    %500 = vmatpush1.msra.mxu0 %v239
    %501 = vmatprep.subr.mxu0 %v236
    %502 = vmatpush1.msra.mxu0 %v235
    %503 = vmatprep.subr.mxu0 %v232
    %504 = vmatpush1.msra.mxu0 %v231
    %505 = vmatprep.subr.mxu0 %v228
    %506 = vmatpush1.msra.mxu0 %v227
    %507 = vmatprep.subr.mxu0 %v224
    %508 = vmatpush1.msra.mxu0 %v223
    %509 = vmatprep.subr.mxu0 %v220
    %510 = vmatpush1.msra.mxu0 %v219
    %511 = vmatprep.subr.mxu0 %v216
    %512 = vmatpush1.msra.mxu0 %v215
    %513 = vmatprep.subr.mxu0 0.0
    %514 = vmatpush2.msra.mxu0 0.0
    %515 = vmatprep.subr.mxu0 0.0
    %516 = vmatpush2.msra.mxu0 0.0
    %517 = vmatprep.subr.mxu0 0.0
    %518 = vmatpush2.msra.mxu0 0.0
    %519 = vmatprep.subr.mxu0 0.0
    %520 = vmatpush2.msra.mxu0 0.0
    %521 = vmatprep.subr.mxu0 0.0
    %522 = vmatpush2.msra.mxu0 0.0
    %523 = vmatprep.subr.mxu0 0.0
    %524 = vmatpush2.msra.mxu0 0.0
    %525 = vmatprep.subr.mxu0 0.0
    %526 = vmatpush2.msra.mxu0 0.0
    %527 = vmatprep.subr.mxu0 0.0
    %528 = vmatpush2.msra.mxu0 0.0
    %529 = vmatprep.subr.mxu0 0.0
    %530 = vmatpush2.msra.mxu0 0.0
    %531 = vmatprep.subr.mxu0 0.0
    %532 = vmatpush2.msra.mxu0 0.0
    %533 = vmatprep.subr.mxu0 0.0
    %534 = vmatpush2.msra.mxu0 0.0
    %535 = vmatprep.subr.mxu0 0.0
    %536 = vmatpush2.msra.mxu0 0.0
    %537 = vmatprep.subr.mxu0 0.0
    %538 = vmatpush2.msra.mxu0 0.0
    %539 = vmatprep.subr.mxu0 0.0
    %540 = vmatpush2.msra.mxu0 0.0
    %541 = vmatprep.subr.mxu0 0.0
    %542 = vmatpush2.msra.mxu0 0.0
    %543 = vmatprep.subr.mxu0 0.0
    %544 = vmatpush2.msra.mxu0 0.0
    %545 = vmatprep.mubr.f32.mxu0 0.0
    %546 = vmatmul.mubr.f32.gmra.mxu0 %v479
    %v547 = vpop.f32.mrf.mxu0
    %v548 = vadd.f32 %v252, %v547
    %v549 = vpop.f32.mrf.mxu0
    %v550 = vadd.f32 %v256, %v549
    %551 = vdwg.mxu0
    %552 = vmatprep.subr.mxu0 0.0
    %553 = vmatpush1.msra.mxu0 0.0
    %554 = vmatprep.subr.mxu0 0.0
    %555 = vmatpush1.msra.mxu0 0.0
    %556 = vmatprep.subr.mxu0 0.0
    %557 = vmatpush1.msra.mxu0 0.0
    %558 = vmatprep.subr.mxu0 0.0
    %559 = vmatpush1.msra.mxu0 0.0
    %560 = vmatprep.subr.mxu0 0.0
    %561 = vmatpush1.msra.mxu0 0.0
    %562 = vmatprep.subr.mxu0 0.0
    %563 = vmatpush1.msra.mxu0 0.0
    %564 = vmatprep.subr.mxu0 0.0
    %565 = vmatpush1.msra.mxu0 0.0
    %566 = vmatprep.subr.mxu0 0.0
    %567 = vmatpush1.msra.mxu0 0.0
    %568 = vmatprep.subr.mxu0 %v246
    %569 = vmatpush1.msra.mxu0 %v245
    %570 = vmatprep.subr.mxu0 %v242
    %571 = vmatpush1.msra.mxu0 %v241
    %572 = vmatprep.subr.mxu0 %v238
    %573 = vmatpush1.msra.mxu0 %v237
    %574 = vmatprep.subr.mxu0 %v234
    %575 = vmatpush1.msra.mxu0 %v233
    %576 = vmatprep.subr.mxu0 %v230
    %577 = vmatpush1.msra.mxu0 %v229
    %578 = vmatprep.subr.mxu0 %v226
    %579 = vmatpush1.msra.mxu0 %v225
    %580 = vmatprep.subr.mxu0 %v222
    %581 = vmatpush1.msra.mxu0 %v221
    %582 = vmatprep.subr.mxu0 %v218
    %583 = vmatpush1.msra.mxu0 %v217
    %584 = vmatprep.subr.mxu0 0.0
    %585 = vmatpush2.msra.mxu0 0.0
    %586 = vmatprep.subr.mxu0 0.0
    %587 = vmatpush2.msra.mxu0 0.0
    %588 = vmatprep.subr.mxu0 0.0
    %589 = vmatpush2.msra.mxu0 0.0
    %590 = vmatprep.subr.mxu0 0.0
    %591 = vmatpush2.msra.mxu0 0.0
    %592 = vmatprep.subr.mxu0 0.0
    %593 = vmatpush2.msra.mxu0 0.0
    %594 = vmatprep.subr.mxu0 0.0
    %595 = vmatpush2.msra.mxu0 0.0
    %596 = vmatprep.subr.mxu0 0.0
    %597 = vmatpush2.msra.mxu0 0.0
    %598 = vmatprep.subr.mxu0 0.0
    %599 = vmatpush2.msra.mxu0 0.0
    %600 = vmatprep.subr.mxu0 0.0
    %601 = vmatpush2.msra.mxu0 0.0
    %602 = vmatprep.subr.mxu0 0.0
    %603 = vmatpush2.msra.mxu0 0.0
    %604 = vmatprep.subr.mxu0 0.0
    %605 = vmatpush2.msra.mxu0 0.0
    %606 = vmatprep.subr.mxu0 0.0
    %607 = vmatpush2.msra.mxu0 0.0
    %608 = vmatprep.subr.mxu0 0.0
    %609 = vmatpush2.msra.mxu0 0.0
    %610 = vmatprep.subr.mxu0 0.0
    %611 = vmatpush2.msra.mxu0 0.0
    %612 = vmatprep.subr.mxu0 0.0
    %613 = vmatpush2.msra.mxu0 0.0
    %614 = vmatprep.subr.mxu0 0.0
    %615 = vmatpush2.msra.mxu0 0.0
    %616 = vmatprep.mubr.f32.mxu0 0.0
    %617 = vmatmul.mubr.f32.gmra.mxu0 %v479
    %v618 = vpop.f32.mrf.mxu0
    %v619 = vadd.f32 %v260, %v618
    %v620 = vpop.f32.mrf.mxu0
    %v621 = vadd.f32 %v264, %v620
    %622 = vdwg.mxu0
    %v623 = vmul.f32 %v548, %v548
    %v624 = vmul.f32 %v550, %v550
    %v625 = vmul.f32 %v619, %v619
    %v626 = vmul.f32 %v621, %v621
    %vm627 = vcmask 1043456
    %v628 = vsel %vm627, %v623, 0.0
    %v629 = vsel %vm627, %v624, 0.0
    %v630 = vadd.f32 %v628, %v629
    %v631 = vsel %vm627, %v625, 0.0
    %v632 = vadd.f32 %v630, %v631
    %v633 = vsel %vm627, %v626, 0.0
    %v634 = vadd.f32 %v632, %v633
    %635 = vadd.xlane.f32.xlu0 %v634
    %v636 = vpop.xlane.xlu0 %635
    %v637 = vmax.f32 %v636, 1e-24
    %v638 = vrsqrt.pop %v637
    %v639 = vmul.f32 %v548, %v638
    %v640 = vmul.f32 %v550, %v638
    %v641 = vmul.f32 %v619, %v638
    %v642 = vmul.f32 %v621, %v638
    %v647 = vcombine.low %v639, %v640
    %v648 = vcombine.low %v641, %v642
    %651 = vst [vmem:[#allocation8] sm:$0xff] %v647
    %652 = vst [vmem:[#allocation8 + $0x8] sm:$0xff] %v648
    // Predicated region
    $region26: #{tpu_custom_call.1} parent=1 // pred_check
      _
    $region27: #{tpu_custom_call.1} parent=1 // pred_check_branch
      %654 = sbr.rel (0) target = $region29
    $region28: #{tpu_custom_call.1} parent=1 // pred_region
      %s656 = ssub.s32 256, 256
      %657 = vsyncadd [#allocation4], %s656
      %s659 = sshll.u32 [#allocation8], 4
      %s660 = int_to_ptr.vmem [resolvable:$true] %s659
      %662 = dma.vmem_to_hbm [thread:$0]  %s660, 256, %s3, [#allocation4]
    $region29: #{tpu_custom_call.1} parent=1 // pred_fallthru
      _
    // Predicated region
    $region30: #{tpu_custom_call.1} parent=1 // pred_check
      _
    $region31: #{tpu_custom_call.1} parent=1 // pred_check_branch
      %664 = sbr.rel (0) target = $region33
    $region32: #{tpu_custom_call.1} parent=1 // pred_region
      %665 = dma.done [#allocation4], 256
    $region33: #{tpu_custom_call.1} parent=1 // pred_fallthru
      _
    %666 = vsyncpa [#allocation3], 1
    %667 = vsyncpa [#allocation6], 1
    %668 = vsyncpa [#allocation4], 1

</llo_original>
